<compile_context>
chip_gen: v7x
topology: tpu7x:2x2x1
jax: 0.10.0
libtpu: 0.0.40
codegen_flags: <defaults>
</compile_context>

<pallas_src>
import functools

import jax
import jax.numpy as jnp
from jax.experimental import pallas as pl
from jax.experimental.pallas import tpu as pltpu

_LANE = 128


def _rmsnorm_kernel(x_ref, w_ref, o_ref, *, eps, inv_h):
    # x_ref: (tm, Hp) row tile, w_ref: (1, Hp) resident f32 weight, o_ref: (tm, Hp).
    xf = x_ref[...].astype(jnp.float32)                       # .to(float32)
    ss = jnp.sum(xf * xf, axis=-1, keepdims=True)             # sum of squares
    inv = jax.lax.rsqrt(ss * inv_h + eps)                     # rsqrt(mean + eps), mean over real H
    # Re-cast from the (possibly narrower-dtype) input buffer for the scale
    # pass so the tm x Hp f32 copy of x doesn't need to stay live across the
    # reduction; the extra vcvt is free VPU filler under the HBM-bound roofline.
    o_ref[...] = (w_ref[...] * (x_ref[...].astype(jnp.float32) * inv)).astype(o_ref.dtype)


def _vmem_budget_bytes():
    """Generation-aware VMEM budget (drives both tile size and vmem_limit_bytes)."""
    cap = 64 * 1024 * 1024  # conservative default: v7x has 64 MiB per TensorCore
    try:
        info = pltpu.get_tpu_info()
        cap = int(getattr(info, "vmem_capacity_bytes", cap))
    except Exception:
        pass
    # Half of physical, capped at 64 MiB: ~32 MiB on v7x, 64 MiB on v5e/v6e.
    return max(16 * 1024 * 1024, min(cap // 2, 64 * 1024 * 1024))


def _choose_block_rows(rows, hidden, dtype, vmem_budget):
    """Row tile: big enough to hide per-step overhead, small enough for VMEM."""
    itemsize = jnp.dtype(dtype).itemsize
    # Sublane packing granularity: 8 rows (32-bit), 16 (bf16), 32 (int8).
    row_align = max(8, 32 // max(itemsize, 1))

    # Per-row VMEM cost across the pipeline: 2 input + 2 output double-buffered
    # tiles in the input dtype, plus ~2 live f32 temporaries per element for the
    # upcast / product in the body.
    bytes_per_row = hidden * (4 * itemsize + 2 * 4)
    # ~85% of HBM roofline is reached with 1-2 MiB x tiles; target <= 4 MiB of
    # raw x per tile and keep the full per-row pipeline cost within half the
    # VMEM budget.
    target_x_tile_bytes = 4 * 1024 * 1024
    tm = min((vmem_budget // 2) // max(bytes_per_row, 1),
             target_x_tile_bytes // max(hidden * itemsize, 1))
    tm = max(row_align, (tm // row_align) * row_align)

    # Keep >= 4 grid steps when possible so both v7x TensorCores (and the
    # software pipeline) have work; harmless on single-TC v5e/v6e.
    min_steps = 4
    if rows > row_align * min_steps:
        tm = min(tm, max(row_align, ((rows // min_steps) // row_align) * row_align))

    # Never larger than the (alignment-rounded) row count.
    rows_aligned = ((rows + row_align - 1) // row_align) * row_align
    tm = min(tm, rows_aligned)

    # TODO(synk): extremely wide H (a single row_align-row tile exceeding the
    # VMEM budget) would need an H-chunked two-pass variant; not needed for
    # typical transformer hidden sizes.
    return tm


def simplified_rms_norm(x, weight, eps=1e-6, *, block_rows=None):
    """x: (..., H) array, weight: (H,). Returns same shape/dtype as x."""
    orig_shape = x.shape
    H = orig_shape[-1]
    rows = 1
    for d in orig_shape[:-1]:
        rows *= d
    x2d = x.reshape(rows, H)
    w1d = weight.reshape(-1)

    # Lane-density guard: pad the feature axis to a multiple of 128 (zero data,
    # zero weight) so the kernel never emits masked partial stores.  The mean
    # divides by the real H, so padding does not perturb the statistics.  No-op
    # for typical transformer H (including hidden_size=128 here).
    Hp = ((H + _LANE - 1) // _LANE) * _LANE
    if Hp != H:
        x2d = jnp.pad(x2d, ((0, 0), (0, Hp - H)))
        w1d = jnp.pad(w1d, ((0, Hp - H),))
    w2d = w1d.reshape(1, Hp).astype(jnp.float32)  # pre-cast once; stays resident

    vmem_budget = _vmem_budget_bytes()
    tm = block_rows if block_rows is not None else _choose_block_rows(
        rows, Hp, x.dtype, vmem_budget)

    # Partial last block: OOB rows compute garbage, but their output writes are
    # masked and nothing crosses rows -> no padding / slicing round trips.
    grid = pl.cdiv(rows, tm)
    kernel = functools.partial(_rmsnorm_kernel, eps=float(eps), inv_h=1.0 / float(H))

    out = pl.pallas_call(
        kernel,
        out_shape=jax.ShapeDtypeStruct((rows, Hp), x.dtype),
        grid_spec=pltpu.PrefetchScalarGridSpec(
            num_scalar_prefetch=0,
            grid=(grid,),
            in_specs=[
                pl.BlockSpec((tm, Hp), lambda i: (i, 0)),   # streaming row tile of x
                pl.BlockSpec((1, Hp), lambda i: (0, 0)),    # weight: resident f32
            ],
            out_specs=pl.BlockSpec((tm, Hp), lambda i: (i, 0)),
        ),
        compiler_params=pltpu.CompilerParams(
            dimension_semantics=("parallel",),              # megacore sharding on v7x
            vmem_limit_bytes=vmem_budget,                   # generation-aware
        ),
    )(x2d, w2d)

    if Hp != H:
        out = out[:, :H]
    return out.reshape(orig_shape)


def _reference(x, weight, eps):
    xf = x.astype(jnp.float32)
    var = jnp.mean(xf * xf, axis=-1, keepdims=True)
    return (weight.astype(jnp.float32) * (xf * jax.lax.rsqrt(var + eps))).astype(x.dtype)


def _check(y, ref, atol):
    assert jnp.allclose(y.astype(jnp.float32), ref.astype(jnp.float32),
                        atol=atol, rtol=atol), "mismatch vs reference"


if __name__ == "__main__":
    hidden_size = 128
    eps = 1e-6
    key = jax.random.PRNGKey(0)

    # Case 1: module spec — (batch=2, seq=8, hidden=128), weight = ones (init).
    weight = jnp.ones((hidden_size,), dtype=jnp.float32)
    x = jax.random.normal(key, (2, 8, hidden_size), dtype=jnp.float32)
    y = jax.block_until_ready(simplified_rms_norm(x, weight, eps=eps))
    _check(y, _reference(x, weight, eps), atol=1e-5)

    # Case 2: bf16 input, non-trivial weight, rows not divisible by the tile
    # -> exercises dtype cast paths and the masked partial last block.
    k1, k2 = jax.random.split(jax.random.PRNGKey(1))
    w_rand = 1.0 + 0.1 * jax.random.normal(k1, (hidden_size,), dtype=jnp.float32)
    x2 = jax.random.normal(k2, (3, 5, hidden_size), dtype=jnp.bfloat16)
    y2 = jax.block_until_ready(simplified_rms_norm(x2, w_rand, eps=eps))
    _check(y2, _reference(x2, w_rand, eps), atol=2e-2)

    # Case 3: hidden dim not a multiple of 128 -> exercises the lane-padding
    # guard (zero-padded features, mean over the real H).
    k3, k4 = jax.random.split(jax.random.PRNGKey(2))
    h3 = 100
    w3 = 1.0 + 0.1 * jax.random.normal(k3, (h3,), dtype=jnp.float32)
    x3 = jax.random.normal(k4, (2, 7, h3), dtype=jnp.float32)
    y3 = jax.block_until_ready(simplified_rms_norm(x3, w3, eps=eps))
    _check(y3, _reference(x3, w3, eps), atol=1e-5)

    print("KERNEL_OK")
</pallas_src>

<mosaic_0001>
module attributes {stable_mosaic.version = 11 : i64} {
  func.func @_rmsnorm_kernel(%arg0: i32, %arg1: memref<16x128xf32, #tpu.memory_space<vmem>>, %arg2: memref<1x128xf32, #tpu.memory_space<vmem>>, %arg3: memref<16x128xf32, #tpu.memory_space<vmem>>) attributes {dimension_semantics = [#tpu.dimension_semantics<parallel>], iteration_bounds = array<i64: 1>, scalar_prefetch = 0 : i64, scratch_operands = 0 : i64, tpu.core_type = #tpu.core_type<tc>, window_params = [{transform_indices = @transform_0, window_bounds = array<i64: 16, 128>}, {pipeline_mode = #tpu.pipeline_mode<synchronous>, transform_indices = @transform_1, window_bounds = array<i64: 1, 128>}, {transform_indices = @transform_2, window_bounds = array<i64: 16, 128>}]} {
    %c0 = arith.constant 0 : index
    %c0_0 = arith.constant 0 : index
    %0 = vector.load %arg1[%c0, %c0_0] : memref<16x128xf32, #tpu.memory_space<vmem>>, vector<16x128xf32>
    %1 = arith.mulf %0, %0 : vector<16x128xf32>
    %cst = arith.constant dense<0.000000e+00> : vector<16xf32>
    %2 = vector.multi_reduction <add>, %1, %cst [1] : vector<16x128xf32> to vector<16xf32>
    %3 = vector.shape_cast %2 : vector<16xf32> to vector<16x1xf32>
    %cst_1 = arith.constant 7.812500e-03 : f32
    %4 = vector.broadcast %cst_1 : f32 to vector<16x1xf32>
    %5 = arith.mulf %3, %4 : vector<16x1xf32>
    %cst_2 = arith.constant 9.99999997E-7 : f32
    %6 = vector.broadcast %cst_2 : f32 to vector<16x1xf32>
    %7 = arith.addf %5, %6 : vector<16x1xf32>
    %8 = math.rsqrt %7 : vector<16x1xf32>
    %c0_3 = arith.constant 0 : index
    %c0_4 = arith.constant 0 : index
    %9 = vector.load %arg2[%c0_3, %c0_4] : memref<1x128xf32, #tpu.memory_space<vmem>>, vector<1x128xf32>
    %c0_5 = arith.constant 0 : index
    %c0_6 = arith.constant 0 : index
    %10 = vector.load %arg1[%c0_5, %c0_6] : memref<16x128xf32, #tpu.memory_space<vmem>>, vector<16x128xf32>
    %11 = vector.broadcast %8 : vector<16x1xf32> to vector<16x128xf32>
    %12 = arith.mulf %10, %11 : vector<16x128xf32>
    %13 = vector.broadcast %9 : vector<1x128xf32> to vector<16x128xf32>
    %14 = arith.mulf %13, %12 : vector<16x128xf32>
    %c0_7 = arith.constant 0 : index
    %c0_8 = arith.constant 0 : index
    %15 = vector.load %arg3[%c0_7, %c0_8] : memref<16x128xf32, #tpu.memory_space<vmem>>, vector<16x128xf32>
    tpu.vector_store %arg3[%c0_7, %c0_8], %14 {strides = array<i32>} : memref<16x128xf32, #tpu.memory_space<vmem>>, vector<16x128xf32>,
    return
  }
  func.func @transform_0(%arg0: i32) -> (i32, i32) {
    %c0_i32 = arith.constant 0 : i32
    %c0_i32_0 = arith.constant 0 : i32
    return %arg0, %c0_i32 : i32, i32
  }
  func.func @transform_1(%arg0: i32) -> (i32, i32) {
    %c0_i32 = arith.constant 0 : i32
    %c0_i32_0 = arith.constant 0 : i32
    %c0_i32_1 = arith.constant 0 : i32
    return %c0_i32, %c0_i32_0 : i32, i32
  }
  func.func @transform_2(%arg0: i32) -> (i32, i32) {
    %c0_i32 = arith.constant 0 : i32
    %c0_i32_0 = arith.constant 0 : i32
    return %arg0, %c0_i32 : i32, i32
  }
}

</mosaic_0001>

<llo_original>
// kernel: tpu_custom_call.1
$region0: #{tpu_custom_call.1}
  #allocation0 [shape = 'u32[]', space=smem, size = 0x4, offset = 0x4, fixed_abs, tag = 'smem constant byte address 0x4 - core index']
  #allocation1 [shape = 'u32[144,128]{1,0:T(1,128)}', space=vmem, size = 0x12000, scoped, tag = 'internal scratch']
  %s0 = inlined_call_operand.hbm [shape: f32[16,128], index: 0, kind: input, shape index: {}]
  %s1 = inlined_call_operand.vmem [shape: f32[1,128], index: 1, kind: input, shape index: {}]
  %s2 = inlined_call_operand.hbm [shape: f32[16,128], index: 2, kind: output, shape index: {}]
  %s3 = sld [smem:[#allocation0]]
  $region22: #{tpu_custom_call.1} parent=0
    _
  %s5 = ssub.s32 1, %s3
  %s6 = scalar_select 0, %s5, %s3
  $region1: #{tpu_custom_call.1} parent=0
    #allocation2 [shape = 'u8[8192]{0}', space=vmem, size = 0x2000, scoped, tag = 'input window, operand 0, single buffered']
    #allocation3 [shape = 's32[1]{0}', space=sflag, size = 0x4, scoped, tag = 'scoped memory for tpu_custom_call.1']
    #allocation4 [shape = 's32[1]{0}', space=sflag, size = 0x4, scoped, tag = 'scoped memory for tpu_custom_call.1']
    #allocation5 [shape = 'u8[8192]{0}', space=vmem, size = 0x2000, scoped, tag = 'output window, operand 0, single buffered']
    %7 = vsyncpa [#allocation3], 0
    %8 = vsyncpa [#allocation4], 0
    // Predicated region
    $region2: #{tpu_custom_call.1} parent=1 // pred_check
      _
    $region3: #{tpu_custom_call.1} parent=1 // pred_check_branch
      %10 = sbr.rel (0) target = $region5
    $region4: #{tpu_custom_call.1} parent=1 // pred_region
      %s12 = ssub.s32 256, 256
      %13 = vsyncadd [#allocation3], %s12
      %s14 = sshll.u32 [#allocation2], 4
      %s15 = int_to_ptr.vmem [resolvable:$true] %s14
      %20 = dma.hbm_to_vmem [thread:$0]  %s0, 256, %s15, [#allocation3], 128, 128, 8
    $region5: #{tpu_custom_call.1} parent=1 // pred_fallthru
      _
    // Predicated region
    $region6: #{tpu_custom_call.1} parent=1 // pred_check
      _
    $region7: #{tpu_custom_call.1} parent=1 // pred_check_branch
      %22 = sbr.rel (0) target = $region9
    $region8: #{tpu_custom_call.1} parent=1 // pred_region
      _
    $region9: #{tpu_custom_call.1} parent=1 // pred_fallthru
      _
    // Predicated region
    $region10: #{tpu_custom_call.1} parent=1 // pred_check
      _
    $region11: #{tpu_custom_call.1} parent=1 // pred_check_branch
      %24 = sbr.rel (0) target = $region13
    $region12: #{tpu_custom_call.1} parent=1 // pred_region
      %25 = dma.done [#allocation3], 256
    $region13: #{tpu_custom_call.1} parent=1 // pred_fallthru
      _
    %v26 = vld [vmem:[#allocation2] sm:$0xff]
    %v27 = vld [vmem:[#allocation2 + $0x8] sm:$0xff]
    %v28 = vmul.f32 %v26, %v26
    %v29 = vmul.f32 %v27, %v27
    %30 = vadd.xlane.f32.xlu0 %v28
    %v31 = vpop.xlane.xlu0 %30
    %32 = vadd.xlane.f32.xlu0 %v29
    %v33 = vpop.xlane.xlu0 %32
    %v34 = vmul.f32 %v31, 0.0078125
    %v35 = vmul.f32 %v33, 0.0078125
    %v36 = vadd.f32 %v34, 1e-06
    %v37 = vadd.f32 %v35, 1e-06
    %v38 = vrsqrt.pop %v36
    %v39 = vrsqrt.pop %v37
    %v40 = vld [vmem:[%s1] sm:$0x1]
    %v41 = vmul.f32 %v26, %v38
    %v42 = vmul.f32 %v27, %v39
    %v44 = vlaneseq
    %v45 = vshrl.u32 %v44, 7
    %v46 = vsub.s32 0, %v45
    %v47 = vrot.slane %v40, %v46
    %v49 = vmul.f32 %v47, %v41
    %v50 = vmul.f32 %v47, %v42
    %51 = vst [vmem:[#allocation5] sm:$0xff] %v49
    %52 = vst [vmem:[#allocation5 + $0x8] sm:$0xff] %v50
    // Predicated region
    $region14: #{tpu_custom_call.1} parent=1 // pred_check
      _
    $region15: #{tpu_custom_call.1} parent=1 // pred_check_branch
      %54 = sbr.rel (0) target = $region17
    $region16: #{tpu_custom_call.1} parent=1 // pred_region
      %s56 = ssub.s32 256, 256
      %57 = vsyncadd [#allocation4], %s56
      %s58 = sshll.u32 [#allocation5], 4
      %s59 = int_to_ptr.vmem [resolvable:$true] %s58
      %64 = dma.vmem_to_hbm [thread:$0]  %s59, 256, %s2, [#allocation4], 128, 128, 8
    $region17: #{tpu_custom_call.1} parent=1 // pred_fallthru
      _
    // Predicated region
    $region18: #{tpu_custom_call.1} parent=1 // pred_check
      _
    $region19: #{tpu_custom_call.1} parent=1 // pred_check_branch
      %66 = sbr.rel (0) target = $region21
    $region20: #{tpu_custom_call.1} parent=1 // pred_region
      %67 = dma.done [#allocation4], 256
    $region21: #{tpu_custom_call.1} parent=1 // pred_fallthru
      _
    %68 = vsyncpa [#allocation3], 1
    %69 = vsyncpa [#allocation4], 1

</llo_original>
